<compile_context>
chip_gen: v7x
topology: tpu7x:2x2x1
jax: 0.10.0
libtpu: 0.0.40
codegen_flags: <defaults>
</compile_context>

<pallas_src>
import jax
import jax.numpy as jnp
from jax.experimental import pallas as pl
from jax.experimental.pallas import tpu as pltpu


MASK_VALUE = -1000000.0  # matches SequenceMask default (used only by the reference mirror)


def _mlp_attention_v2_kernel(val_ref,   # (TB, K, V) value block in VMEM
                             o_ref):    # (TB, V)    output block in VMEM
    # weights are identically 1.0 (softmax over a size-1 axis), so the attention
    # output is simply the sum of values over the key axis.
    o_ref[...] = jnp.sum(val_ref[...], axis=1).astype(o_ref.dtype)


def mlp_attention_v2_forward(query, key, value, valid_len, wq_t, wk_t, v_w,
                             *, block_b=256):
    """Pallas forward of MLPAttention_v2 (inference).

    query: (B, 1, D)  key: (B, K, D)  value: (B, K, V)  valid_len: (B,) int32
    wq_t, wk_t: (D, U) = torch {wq,wk}.weight.T ;  v_w: (1, 2U) = torch v.weight
    Returns (B, 1, V).

    query/key/valid_len and the weights do not influence the output (softmax over a
    size-1 axis makes the attention weights exactly 1.0), so they are accepted for
    interface fidelity but never DMA'd into the kernel.
    """
    del query, key, valid_len, wq_t, wk_t, v_w  # mathematically dead (see header note)
    B, K, V = value.shape

    TB = min(B, block_b)            # batch rows per grid step (sublane-dense output slab)
    grid = (pl.cdiv(B, TB),)

    out = pl.pallas_call(
        _mlp_attention_v2_kernel,
        out_shape=jax.ShapeDtypeStruct((B, V), value.dtype),
        grid_spec=pl.GridSpec(
            grid=grid,
            in_specs=[
                pl.BlockSpec((TB, K, V), lambda i: (i, 0, 0)),   # value slab
            ],
            out_specs=pl.BlockSpec((TB, V), lambda i: (i, 0)),   # lane-dense output slab
        ),
        compiler_params=pltpu.CompilerParams(
            dimension_semantics=("parallel",),
        ),
    )(value)

    # Layout plumbing only: present the module's (B, 1, V) output shape.
    return out.reshape(B, 1, V)


def _reference_forward(query, key, value, valid_len, wq_t, wk_t, v_w):
    """Pure-JAX mirror of the PyTorch forward (full scoring path, for validation)."""
    K = key.shape[1]
    q_proj = query @ wq_t                                    # (B, 1, U)
    k_proj = key @ wk_t                                      # (B, K, U)
    features = jnp.concatenate(
        [jnp.tile(q_proj, (1, K, 1)), k_proj], axis=-1)      # (B, K, 2U)
    scores = features @ v_w.T                                # (B, K, 1)
    shape = scores.shape
    X = scores.reshape(-1, shape[-1])                        # (B*K, 1)
    vl = jnp.repeat(valid_len.astype(jnp.float32), shape[1])
    mask = jnp.arange(shape[-1], dtype=jnp.float32)[None, :] < vl[:, None]
    X = jnp.where(mask, X, MASK_VALUE)
    weights = jax.nn.softmax(X, axis=-1).reshape(shape)      # (B, K, 1); identically 1.0
    return jnp.matmul(jnp.swapaxes(weights, 1, 2), value)    # (B, 1, V)


def _run_case(rng, B, K, D, U, V, block_b):
    k1, k2, k3, k4, k5, k6, k7 = jax.random.split(rng, 7)
    query = jax.random.normal(k1, (B, 1, D), dtype=jnp.float32)
    key_t = jax.random.normal(k2, (B, K, D), dtype=jnp.float32)
    value = jax.random.normal(k3, (B, K, V), dtype=jnp.float32)
    valid_len = jax.random.randint(k7, (B,), 0, 4).astype(jnp.int32)

    scale = 1.0 / jnp.sqrt(jnp.float32(D))
    wq_t = jax.random.normal(k4, (D, U), dtype=jnp.float32) * scale      # torch wq.weight.T
    wk_t = jax.random.normal(k5, (D, U), dtype=jnp.float32) * scale      # torch wk.weight.T
    v_w = jax.random.normal(k6, (1, 2 * U), dtype=jnp.float32) * scale   # torch v.weight

    y = mlp_attention_v2_forward(query, key_t, value, valid_len, wq_t, wk_t, v_w,
                                 block_b=block_b)
    y = jax.block_until_ready(y)

    y_ref = _reference_forward(query, key_t, value, valid_len, wq_t, wk_t, v_w)
    assert y.shape == (B, 1, V) and y.dtype == jnp.float32
    assert bool(jnp.allclose(y, y_ref, atol=1e-5, rtol=1e-5)), "mismatch vs reference"


if __name__ == "__main__":
    root = jax.random.PRNGKey(0)
    r1, r2 = jax.random.split(root, 2)

    # Small shapes consistent with the module: batch=2, seq(K)=8, hidden=32.
    _run_case(r1, B=2, K=8, D=32, U=32, V=32, block_b=256)     # single grid step
    # Exercise the batch-blocked multi-step grid path as well.
    _run_case(r2, B=16, K=8, D=32, U=32, V=32, block_b=8)      # grid = (2,)

    print("KERNEL_OK")
</pallas_src>

<mosaic_0001>
module attributes {stable_mosaic.version = 11 : i64} {
  func.func @_mlp_attention_v2_kernel(%arg0: i32, %arg1: memref<2x8x32xf32, #tpu.memory_space<vmem>>, %arg2: memref<2x32xf32, #tpu.memory_space<vmem>>) attributes {dimension_semantics = [#tpu.dimension_semantics<parallel>], iteration_bounds = array<i64: 1>, scalar_prefetch = 0 : i64, scratch_operands = 0 : i64, tpu.core_type = #tpu.core_type<tc>, window_params = [{transform_indices = @transform_0, window_bounds = array<i64: 2, 8, 32>}, {transform_indices = @transform_1, window_bounds = array<i64: 2, 32>}]} {
    %c0 = arith.constant 0 : index
    %c0_0 = arith.constant 0 : index
    %c0_1 = arith.constant 0 : index
    %0 = vector.load %arg1[%c0, %c0_0, %c0_1] : memref<2x8x32xf32, #tpu.memory_space<vmem>>, vector<2x8x32xf32>
    %cst = arith.constant dense<0.000000e+00> : vector<2x32xf32>
    %1 = vector.multi_reduction <add>, %0, %cst [1] : vector<2x8x32xf32> to vector<2x32xf32>
    %c0_2 = arith.constant 0 : index
    %c0_3 = arith.constant 0 : index
    %2 = vector.load %arg2[%c0_2, %c0_3] : memref<2x32xf32, #tpu.memory_space<vmem>>, vector<2x32xf32>
    tpu.vector_store %arg2[%c0_2, %c0_3], %1 {strides = array<i32>} : memref<2x32xf32, #tpu.memory_space<vmem>>, vector<2x32xf32>,
    return
  }
  func.func @transform_0(%arg0: i32) -> (i32, i32, i32) {
    %c0_i32 = arith.constant 0 : i32
    %c0_i32_0 = arith.constant 0 : i32
    %c0_i32_1 = arith.constant 0 : i32
    return %arg0, %c0_i32, %c0_i32_0 : i32, i32, i32
  }
  func.func @transform_1(%arg0: i32) -> (i32, i32) {
    %c0_i32 = arith.constant 0 : i32
    %c0_i32_0 = arith.constant 0 : i32
    return %arg0, %c0_i32 : i32, i32
  }
}

</mosaic_0001>

<llo_original>
// kernel: tpu_custom_call.1
$region0: #{tpu_custom_call.1}
  #allocation0 [shape = 'u32[]', space=smem, size = 0x4, offset = 0x4, fixed_abs, tag = 'smem constant byte address 0x4 - core index']
  #allocation1 [shape = 'u32[144,128]{1,0:T(1,128)}', space=vmem, size = 0x12000, scoped, tag = 'internal scratch']
  %s0 = inlined_call_operand.hbm [shape: f32[2,8,32], index: 0, kind: input, shape index: {}]
  %s1 = inlined_call_operand.hbm [shape: f32[2,32], index: 1, kind: output, shape index: {}]
  %s2 = sld [smem:[#allocation0]]
  $region18: #{tpu_custom_call.1} parent=0
    _
  %s4 = ssub.s32 1, %s2
  %s5 = scalar_select 0, %s4, %s2
  $region1: #{tpu_custom_call.1} parent=0
    #allocation2 [shape = 'u8[8192]{0}', space=vmem, size = 0x2000, scoped, tag = 'input window, operand 0, single buffered']
    #allocation3 [shape = 's32[1]{0}', space=sflag, size = 0x4, scoped, tag = 'scoped memory for tpu_custom_call.1']
    #allocation4 [shape = 's32[1]{0}', space=sflag, size = 0x4, scoped, tag = 'scoped memory for tpu_custom_call.1']
    #allocation5 [shape = 'u8[1024]{0}', space=vmem, size = 0x400, scoped, tag = 'output window, operand 0, single buffered']
    %6 = vsyncpa [#allocation3], 0
    %7 = vsyncpa [#allocation4], 0
    // Predicated region
    $region2: #{tpu_custom_call.1} parent=1 // pred_check
      _
    $region3: #{tpu_custom_call.1} parent=1 // pred_check_branch
      %9 = sbr.rel (0) target = $region5
    $region4: #{tpu_custom_call.1} parent=1 // pred_region
      %s11 = ssub.s32 256, 256
      %12 = vsyncadd [#allocation3], %s11
      %s13 = sshll.u32 [#allocation2], 4
      %s14 = int_to_ptr.vmem [resolvable:$true] %s13
      %19 = dma.hbm_to_vmem [thread:$0]  %s0, 256, %s14, [#allocation3], 128, 128, 8
    $region5: #{tpu_custom_call.1} parent=1 // pred_fallthru
      _
    // Predicated region
    $region6: #{tpu_custom_call.1} parent=1 // pred_check
      _
    $region7: #{tpu_custom_call.1} parent=1 // pred_check_branch
      %21 = sbr.rel (0) target = $region9
    $region8: #{tpu_custom_call.1} parent=1 // pred_region
      %22 = dma.done [#allocation3], 256
    $region9: #{tpu_custom_call.1} parent=1 // pred_fallthru
      _
    %v23 = vld [vmem:[#allocation2] sm:$0xff]
    %v24 = vld [vmem:[#allocation2 + $0x8] sm:$0xff]
    %vm25 = vcmask 261120
    %v26 = vsel %vm25, %v23, 0.0
    %v27 = vrot.slane %v26, 4
    %v28 = vadd.f32 %v26, %v27
    %v29 = vrot.slane %v28, 2
    %v30 = vadd.f32 %v28, %v29
    %v31 = vrot.slane %v30, 1
    %v32 = vadd.f32 %v30, %v31
    %v33 = vsel %vm25, %v24, 0.0
    %v34 = vrot.slane %v33, 4
    %v35 = vadd.f32 %v33, %v34
    %v36 = vrot.slane %v35, 2
    %v37 = vadd.f32 %v35, %v36
    %v38 = vrot.slane %v37, 1
    %v39 = vadd.f32 %v37, %v38
    %vm42 = vcmask 1041409
    %v43 = vsel %vm42, %v39, %v32
    %vm45 = vcmask 254976
    %46 = vst.msk [vmem:[#allocation5] sm:$0x3] %vm45, %v43
    // Predicated region
    $region10: #{tpu_custom_call.1} parent=1 // pred_check
      _
    $region11: #{tpu_custom_call.1} parent=1 // pred_check_branch
      %48 = sbr.rel (0) target = $region13
    $region12: #{tpu_custom_call.1} parent=1 // pred_region
      %s50 = ssub.s32 32, 32
      %51 = vsyncadd [#allocation4], %s50
      %s53 = sshll.u32 [#allocation5], 4
      %s54 = int_to_ptr.vmem [resolvable:$true] %s53
      %56 = dma.vmem_to_hbm [thread:$0]  %s54, 32, %s1, [#allocation4]
    $region13: #{tpu_custom_call.1} parent=1 // pred_fallthru
      _
    // Predicated region
    $region14: #{tpu_custom_call.1} parent=1 // pred_check
      _
    $region15: #{tpu_custom_call.1} parent=1 // pred_check_branch
      %58 = sbr.rel (0) target = $region17
    $region16: #{tpu_custom_call.1} parent=1 // pred_region
      %59 = dma.done [#allocation4], 32
    $region17: #{tpu_custom_call.1} parent=1 // pred_fallthru
      _
    %60 = vsyncpa [#allocation3], 1
    %61 = vsyncpa [#allocation4], 1

</llo_original>
